<compile_context>
chip_gen: v7x
topology: tpu7x:2x2x1
jax: 0.10.0
libtpu: 0.0.40
codegen_flags: <defaults>
</compile_context>

<pallas_src>
import functools

import jax
import jax.numpy as jnp
from jax import lax
from jax.experimental import pallas as pl
from jax.experimental.pallas import tpu as pltpu


def _self_attention_kernel(x_ref, wqkv_ref, wo_ref, bias_ref, mask_ref, o_ref,
                           *, inner):
    x = x_ref[0].astype(jnp.float32)                      # (C, N)

    # GroupNorm(1, C): per-sample stats over all C*H*W elements, single pass.
    # The same normalized tensor feeds q/k/v (only the affine differs, and
    # that is folded into the projection weights in the wrapper).
    mean = jnp.mean(x)
    var = jnp.mean(x * x) - mean * mean
    xn = (x - mean) * lax.rsqrt(var + 1e-5)               # (C, N)

    bias = bias_ref[...].astype(jnp.float32)              # (3*inner + C, 1)

    # Fused q/k/v projection: one MXU matmul, (3*inner, C) @ (C, N).
    qkv = jnp.dot(wqkv_ref[...], xn,
                  preferred_element_type=jnp.float32)     # (3*inner, N)
    qkv = qkv + bias[0:3 * inner]

    q = qkv[0 * inner:1 * inner]                          # (inner, N)
    k = qkv[1 * inner:2 * inner]                          # (inner, N)
    v = qkv[2 * inner:3 * inner]                          # (inner, N)

    # Feature map: elu(x) + 1  ==  x + 1 (x > 0) else exp(x).  exp runs on the
    # EUP slot; the select is cheap VALU work.
    q = jnp.where(q > 0, q + 1.0, jnp.exp(q))
    k = jnp.where(k > 0, k + 1.0, jnp.exp(k))

    # Normalize K over spatial positions (sum over N), clamp at 1e-5.
    k_sum = jnp.sum(k, axis=1, keepdims=True)             # (inner, 1)
    inv = pl.reciprocal(jnp.maximum(k_sum, 1e-5), approx=True)
    kn = k * inv                                          # (inner, N)

    # Full context (inner x inner) with block-diagonal head mask; exactly
    # equivalent to the per-head loop (cross-head terms zeroed by {0,1} mask).
    ctx = lax.dot_general(v, kn, (((1,), (1,)), ((), ())),
                          preferred_element_type=jnp.float32)   # (inner, inner)
    ctx = ctx * mask_ref[...]

    # Fuse out_proj into the context:  y = (Wo @ ctx_masked) @ q + bo.
    wctx = jnp.dot(wo_ref[...], ctx,
                   preferred_element_type=jnp.float32)    # (C, inner)
    y = jnp.dot(wctx, q, preferred_element_type=jnp.float32)    # (C, N)
    y = y + bias[3 * inner:]
    o_ref[0] = y.astype(o_ref.dtype)


def self_attention_pallas(x_nchw, params, num_heads):
    B, C, H, W = x_nchw.shape
    N = H * W
    head_dim = (C // num_heads) * 3
    inner = head_dim * num_heads

    (gq_w, gq_b, gk_w, gk_b, gv_w, gv_b,
     wq, bq, wk, bk, wv, bv, wo, bo) = params

    # Fold GroupNorm affine into the 1x1-conv weight / bias:
    #   (xn*gw + gb) @ W + b  ==  xn @ (gw[:,None]*W) + (gb @ W + b)
    def fold(gw, gb, w, b):
        gw = gw.reshape(-1)
        gb = gb.reshape(-1)
        b = b.reshape(-1)
        w_f = w * gw[:, None]                               # (C, inner)
        b_f = b + jnp.sum(gb[:, None] * w, axis=0)          # (inner,)
        return w_f.T, b_f                                   # (inner, C), (inner,)

    wq_f, bq_f = fold(gq_w, gq_b, wq, bq)
    wk_f, bk_f = fold(gk_w, gk_b, wk, bk)
    wv_f, bv_f = fold(gv_w, gv_b, wv, bv)

    w_qkv = jnp.concatenate([wq_f, wk_f, wv_f], axis=0)     # (3*inner, C)
    biases = jnp.concatenate(
        [bq_f, bk_f, bv_f, bo.reshape(-1)], axis=0)[:, None]  # (3*inner+C, 1)
    wo_t = jnp.transpose(wo)                                 # (C, inner)

    # Block-diagonal head mask (constant, built once in the wrapper).
    hid = jnp.arange(inner) // head_dim
    mask = (hid[:, None] == hid[None, :]).astype(jnp.float32)  # (inner, inner)

    # NCHW -> channels-first token matrix: free reshape, no transpose.
    x = x_nchw.reshape(B, C, N)

    kernel = functools.partial(_self_attention_kernel, inner=inner)

    out = pl.pallas_call(
        kernel,
        out_shape=jax.ShapeDtypeStruct((B, C, N), x.dtype),
        grid=(B,),
        in_specs=[
            pl.BlockSpec((1, C, N), lambda b: (b, 0, 0)),          # x
            pl.BlockSpec((3 * inner, C), lambda b: (0, 0)),        # fused Wqkv
            pl.BlockSpec((C, inner), lambda b: (0, 0)),            # Wo^T
            pl.BlockSpec((3 * inner + C, 1), lambda b: (0, 0)),    # all biases
            pl.BlockSpec((inner, inner), lambda b: (0, 0)),        # head mask
        ],
        out_specs=pl.BlockSpec((1, C, N), lambda b: (b, 0, 0)),
        compiler_params=pltpu.CompilerParams(
            dimension_semantics=("parallel",)),   # batch elements independent
    )(x, w_qkv, wo_t, biases, mask)

    return out.reshape(B, C, H, W)


def self_attention_reference(x, params, num_heads):
    """Pure-JAX replica of the PyTorch forward (NCHW), for verification."""
    B, C, H, W = x.shape
    N = H * W
    head_dim = (C // num_heads) * 3
    inner = head_dim * num_heads
    (gq_w, gq_b, gk_w, gk_b, gv_w, gv_b,
     wq, bq, wk, bk, wv, bv, wo, bo) = params

    def gn(x, w, b):
        mean = jnp.mean(x, axis=(1, 2, 3), keepdims=True)
        var = jnp.mean((x - mean) ** 2, axis=(1, 2, 3), keepdims=True)
        xn = (x - mean) / jnp.sqrt(var + 1e-5)
        return xn * w.reshape(1, C, 1, 1) + b.reshape(1, C, 1, 1)

    def conv1x1(x, w_in_out, b):
        y = jnp.einsum('bchw,co->bohw', x, w_in_out,
                       precision=lax.Precision.HIGHEST)
        return y + b.reshape(1, -1, 1, 1)

    q = conv1x1(gn(x, gq_w.ravel(), gq_b.ravel()), wq, bq.ravel())
    k = conv1x1(gn(x, gk_w.ravel(), gk_b.ravel()), wk, bk.ravel())
    v = conv1x1(gn(x, gv_w.ravel(), gv_b.ravel()), wv, bv.ravel())

    q = q.reshape(B, num_heads, head_dim, N)
    k = k.reshape(B, num_heads, head_dim, N)
    v = v.reshape(B, num_heads, head_dim, N)
    q = jax.nn.elu(q) + 1.0
    k = jax.nn.elu(k) + 1.0
    k_sum = jnp.clip(jnp.sum(k, axis=-1, keepdims=True), 1e-5, None)
    kn = k / k_sum
    ctx = jnp.einsum('bhdn,bhen->bhde', v, kn,
                     precision=lax.Precision.HIGHEST)
    out = jnp.einsum('bhde,bhen->bhdn', ctx, q,
                     precision=lax.Precision.HIGHEST)
    out = out.reshape(B, inner, H, W)
    out = jnp.einsum('bchw,co->bohw', out, wo,
                     precision=lax.Precision.HIGHEST) + bo.reshape(1, -1, 1, 1)
    return out


if __name__ == "__main__":
    # Module config (small): channels=8, num_heads=4 -> head_dim=6, inner_dim=24
    B, C, H, W = 2, 8, 16, 16
    num_heads = 4
    head_dim = (C // num_heads) * 3
    inner = head_dim * num_heads

    key = jax.random.PRNGKey(0)
    keys = jax.random.split(key, 16)

    x = jax.random.normal(keys[0], (B, C, H, W), dtype=jnp.float32)

    # GroupNorm affine params (stored as (1, C)).
    gq_w = 1.0 + 0.1 * jax.random.normal(keys[1], (1, C), jnp.float32)
    gq_b = 0.1 * jax.random.normal(keys[2], (1, C), jnp.float32)
    gk_w = 1.0 + 0.1 * jax.random.normal(keys[3], (1, C), jnp.float32)
    gk_b = 0.1 * jax.random.normal(keys[4], (1, C), jnp.float32)
    gv_w = 1.0 + 0.1 * jax.random.normal(keys[5], (1, C), jnp.float32)
    gv_b = 0.1 * jax.random.normal(keys[6], (1, C), jnp.float32)

    # 1x1-conv weights stored as (Cin, Cout).
    wq = 0.2 * jax.random.normal(keys[7], (C, inner), jnp.float32)
    bq = 0.1 * jax.random.normal(keys[8], (1, inner), jnp.float32)
    wk = 0.2 * jax.random.normal(keys[9], (C, inner), jnp.float32)
    bk = 0.1 * jax.random.normal(keys[10], (1, inner), jnp.float32)
    wv = 0.2 * jax.random.normal(keys[11], (C, inner), jnp.float32)
    bv = 0.1 * jax.random.normal(keys[12], (1, inner), jnp.float32)
    wo = 0.2 * jax.random.normal(keys[13], (inner, C), jnp.float32)
    bo = 0.1 * jax.random.normal(keys[14], (1, C), jnp.float32)

    params = (gq_w, gq_b, gk_w, gk_b, gv_w, gv_b,
              wq, bq, wk, bk, wv, bv, wo, bo)

    out = self_attention_pallas(x, params, num_heads)
    out = jax.block_until_ready(out)

    ref = jax.block_until_ready(self_attention_reference(x, params, num_heads))
    assert out.shape == (B, C, H, W), out.shape
    max_err = float(jnp.max(jnp.abs(out - ref)))
    assert max_err < 2e-2, f"max abs err {max_err}"

    print("KERNEL_OK")
</pallas_src>

<mosaic_0001>
module attributes {stable_mosaic.version = 11 : i64} {
  func.func @_self_attention_kernel(%arg0: i32, %arg1: memref<1x8x256xf32, #tpu.memory_space<vmem>>, %arg2: memref<72x8xf32, #tpu.memory_space<vmem>>, %arg3: memref<8x24xf32, #tpu.memory_space<vmem>>, %arg4: memref<80x1xf32, #tpu.memory_space<vmem>>, %arg5: memref<24x24xf32, #tpu.memory_space<vmem>>, %arg6: memref<1x8x256xf32, #tpu.memory_space<vmem>>) attributes {dimension_semantics = [#tpu.dimension_semantics<parallel>], iteration_bounds = array<i64: 2>, scalar_prefetch = 0 : i64, scratch_operands = 0 : i64, tpu.core_type = #tpu.core_type<tc>, window_params = [{transform_indices = @transform_0, window_bounds = array<i64: 1, 8, 256>}, {pipeline_mode = #tpu.pipeline_mode<synchronous>, transform_indices = @transform_1, window_bounds = array<i64: 72, 8>}, {pipeline_mode = #tpu.pipeline_mode<synchronous>, transform_indices = @transform_2, window_bounds = array<i64: 8, 24>}, {pipeline_mode = #tpu.pipeline_mode<synchronous>, transform_indices = @transform_3, window_bounds = array<i64: 80, 1>}, {pipeline_mode = #tpu.pipeline_mode<synchronous>, transform_indices = @transform_4, window_bounds = array<i64: 24, 24>}, {transform_indices = @transform_5, window_bounds = array<i64: 1, 8, 256>}]} {
    %c0 = arith.constant 0 : index
    %c0_0 = arith.constant 0 : index
    %c0_1 = arith.constant 0 : index
    %0 = vector.load %arg1[%c0, %c0_0, %c0_1] : memref<1x8x256xf32, #tpu.memory_space<vmem>>, vector<1x8x256xf32>
    %1 = vector.shape_cast %0 : vector<1x8x256xf32> to vector<8x256xf32>
    %2 = vector.shape_cast %1 : vector<8x256xf32> to vector<1x8x256xf32>
    %cst = arith.constant dense<0.000000e+00> : vector<1xf32>
    %3 = vector.multi_reduction <add>, %2, %cst [1, 2] : vector<1x8x256xf32> to vector<1xf32>
    %4 = vector.shape_cast %3 : vector<1xf32> to vector<1x1x1xf32>
    %5 = vector.extract %4[0, 0, 0] : f32 from vector<1x1x1xf32>
    %cst_2 = arith.constant 2.048000e+03 : f32
    %6 = arith.divf %5, %cst_2 : f32
    %7 = arith.mulf %1, %1 : vector<8x256xf32>
    %8 = vector.shape_cast %7 : vector<8x256xf32> to vector<1x8x256xf32>
    %cst_3 = arith.constant dense<0.000000e+00> : vector<1xf32>
    %9 = vector.multi_reduction <add>, %8, %cst_3 [1, 2] : vector<1x8x256xf32> to vector<1xf32>
    %10 = vector.shape_cast %9 : vector<1xf32> to vector<1x1x1xf32>
    %11 = vector.extract %10[0, 0, 0] : f32 from vector<1x1x1xf32>
    %cst_4 = arith.constant 2.048000e+03 : f32
    %12 = arith.divf %11, %cst_4 : f32
    %13 = arith.mulf %6, %6 : f32
    %14 = arith.subf %12, %13 : f32
    %15 = vector.broadcast %6 : f32 to vector<8x256xf32>
    %16 = arith.subf %1, %15 : vector<8x256xf32>
    %cst_5 = arith.constant 9.99999974E-6 : f32
    %17 = arith.addf %14, %cst_5 : f32
    %18 = math.rsqrt %17 : f32
    %19 = vector.broadcast %18 : f32 to vector<8x256xf32>
    %20 = arith.mulf %16, %19 : vector<8x256xf32>
    %c0_6 = arith.constant 0 : index
    %c0_7 = arith.constant 0 : index
    %21 = vector.load %arg4[%c0_6, %c0_7] : memref<80x1xf32, #tpu.memory_space<vmem>>, vector<80x1xf32>
    %c0_8 = arith.constant 0 : index
    %c0_9 = arith.constant 0 : index
    %22 = vector.load %arg2[%c0_8, %c0_9] : memref<72x8xf32, #tpu.memory_space<vmem>>, vector<72x8xf32>
    %cst_10 = arith.constant dense<0.000000e+00> : vector<72x256xf32>
    %23 = tpu.matmul %22, %20, %cst_10 {dimension_numbers = #tpu.dot_dimension_numbers<[1], [0], [0], [1], [0, 0, 1, 1], [], []>} : vector<72x8xf32>, vector<8x256xf32>, vector<72x256xf32> -> vector<72x256xf32>
    %24 = vector.extract_strided_slice %21 {offsets = [0, 0], sizes = [72, 1], strides = [1, 1]} : vector<80x1xf32> to vector<72x1xf32>
    %25 = vector.broadcast %24 : vector<72x1xf32> to vector<72x256xf32>
    %26 = arith.addf %23, %25 : vector<72x256xf32>
    %27 = vector.extract_strided_slice %26 {offsets = [0, 0], sizes = [24, 256], strides = [1, 1]} : vector<72x256xf32> to vector<24x256xf32>
    %28 = vector.extract_strided_slice %26 {offsets = [24, 0], sizes = [24, 256], strides = [1, 1]} : vector<72x256xf32> to vector<24x256xf32>
    %29 = vector.extract_strided_slice %26 {offsets = [48, 0], sizes = [24, 256], strides = [1, 1]} : vector<72x256xf32> to vector<24x256xf32>
    %cst_11 = arith.constant 0.000000e+00 : f32
    %30 = vector.broadcast %cst_11 : f32 to vector<24x256xf32>
    %31 = arith.cmpf ogt, %27, %30 : vector<24x256xf32>
    %cst_12 = arith.constant 1.000000e+00 : f32
    %32 = vector.broadcast %cst_12 : f32 to vector<24x256xf32>
    %33 = arith.addf %27, %32 : vector<24x256xf32>
    %34 = math.exp %27 : vector<24x256xf32>
    %35 = arith.select %31, %33, %34 : vector<24x256xi1>, vector<24x256xf32>
    %cst_13 = arith.constant 0.000000e+00 : f32
    %36 = vector.broadcast %cst_13 : f32 to vector<24x256xf32>
    %37 = arith.cmpf ogt, %28, %36 : vector<24x256xf32>
    %cst_14 = arith.constant 1.000000e+00 : f32
    %38 = vector.broadcast %cst_14 : f32 to vector<24x256xf32>
    %39 = arith.addf %28, %38 : vector<24x256xf32>
    %40 = math.exp %28 : vector<24x256xf32>
    %41 = arith.select %37, %39, %40 : vector<24x256xi1>, vector<24x256xf32>
    %cst_15 = arith.constant dense<0.000000e+00> : vector<24xf32>
    %42 = vector.multi_reduction <add>, %41, %cst_15 [1] : vector<24x256xf32> to vector<24xf32>
    %43 = vector.shape_cast %42 : vector<24xf32> to vector<24x1xf32>
    %cst_16 = arith.constant 9.99999974E-6 : f32
    %44 = vector.broadcast %cst_16 : f32 to vector<24x1xf32>
    %45 = arith.maximumf %43, %44 : vector<24x1xf32>
    %46 = tpu.reciprocal %45 {approx = true} : vector<24x1xf32> -> vector<24x1xf32>
    %47 = vector.broadcast %46 : vector<24x1xf32> to vector<24x256xf32>
    %48 = arith.mulf %41, %47 : vector<24x256xf32>
    %cst_17 = arith.constant dense<0.000000e+00> : vector<24x24xf32>
    %49 = tpu.matmul %29, %48, %cst_17 {dimension_numbers = #tpu.dot_dimension_numbers<[1], [1], [0], [0], [0, 0, 1, 0], [], []>} : vector<24x256xf32>, vector<24x256xf32>, vector<24x24xf32> -> vector<24x24xf32>
    %c0_18 = arith.constant 0 : index
    %c0_19 = arith.constant 0 : index
    %50 = vector.load %arg5[%c0_18, %c0_19] : memref<24x24xf32, #tpu.memory_space<vmem>>, vector<24x24xf32>
    %51 = arith.mulf %49, %50 : vector<24x24xf32>
    %c0_20 = arith.constant 0 : index
    %c0_21 = arith.constant 0 : index
    %52 = vector.load %arg3[%c0_20, %c0_21] : memref<8x24xf32, #tpu.memory_space<vmem>>, vector<8x24xf32>
    %cst_22 = arith.constant dense<0.000000e+00> : vector<8x24xf32>
    %53 = tpu.matmul %52, %51, %cst_22 {dimension_numbers = #tpu.dot_dimension_numbers<[1], [0], [0], [1], [0, 0, 1, 1], [], []>} : vector<8x24xf32>, vector<24x24xf32>, vector<8x24xf32> -> vector<8x24xf32>
    %cst_23 = arith.constant dense<0.000000e+00> : vector<8x256xf32>
    %54 = tpu.matmul %53, %35, %cst_23 {dimension_numbers = #tpu.dot_dimension_numbers<[1], [0], [0], [1], [0, 0, 1, 1], [], []>} : vector<8x24xf32>, vector<24x256xf32>, vector<8x256xf32> -> vector<8x256xf32>
    %55 = vector.extract_strided_slice %21 {offsets = [72, 0], sizes = [8, 1], strides = [1, 1]} : vector<80x1xf32> to vector<8x1xf32>
    %56 = vector.broadcast %55 : vector<8x1xf32> to vector<8x256xf32>
    %57 = arith.addf %54, %56 : vector<8x256xf32>
    %c0_24 = arith.constant 0 : index
    %c0_25 = arith.constant 0 : index
    %c0_26 = arith.constant 0 : index
    %58 = vector.load %arg6[%c0_24, %c0_25, %c0_26] : memref<1x8x256xf32, #tpu.memory_space<vmem>>, vector<1x8x256xf32>
    %59 = vector.shape_cast %58 : vector<1x8x256xf32> to vector<8x256xf32>
    %60 = vector.shape_cast %57 : vector<8x256xf32> to vector<1x8x256xf32>
    tpu.vector_store %arg6[%c0_24, %c0_25, %c0_26], %60 {strides = array<i32>} : memref<1x8x256xf32, #tpu.memory_space<vmem>>, vector<1x8x256xf32>,
    return
  }
  func.func @transform_0(%arg0: i32) -> (i32, i32, i32) {
    %c0_i32 = arith.constant 0 : i32
    %c0_i32_0 = arith.constant 0 : i32
    %c0_i32_1 = arith.constant 0 : i32
    return %arg0, %c0_i32, %c0_i32_0 : i32, i32, i32
  }
  func.func @transform_1(%arg0: i32) -> (i32, i32) {
    %c0_i32 = arith.constant 0 : i32
    %c0_i32_0 = arith.constant 0 : i32
    %c0_i32_1 = arith.constant 0 : i32
    return %c0_i32, %c0_i32_0 : i32, i32
  }
  func.func @transform_2(%arg0: i32) -> (i32, i32) {
    %c0_i32 = arith.constant 0 : i32
    %c0_i32_0 = arith.constant 0 : i32
    %c0_i32_1 = arith.constant 0 : i32
    return %c0_i32, %c0_i32_0 : i32, i32
  }
  func.func @transform_3(%arg0: i32) -> (i32, i32) {
    %c0_i32 = arith.constant 0 : i32
    %c0_i32_0 = arith.constant 0 : i32
    %c0_i32_1 = arith.constant 0 : i32
    return %c0_i32, %c0_i32_0 : i32, i32
  }
  func.func @transform_4(%arg0: i32) -> (i32, i32) {
    %c0_i32 = arith.constant 0 : i32
    %c0_i32_0 = arith.constant 0 : i32
    %c0_i32_1 = arith.constant 0 : i32
    return %c0_i32, %c0_i32_0 : i32, i32
  }
  func.func @transform_5(%arg0: i32) -> (i32, i32, i32) {
    %c0_i32 = arith.constant 0 : i32
    %c0_i32_0 = arith.constant 0 : i32
    %c0_i32_1 = arith.constant 0 : i32
    return %arg0, %c0_i32, %c0_i32_0 : i32, i32, i32
  }
}

</mosaic_0001>

<llo_original>
// kernel: tpu_custom_call.1
$region0: #{tpu_custom_call.1}
  #allocation0 [shape = 'u32[]', space=smem, size = 0x4, offset = 0x4, fixed_abs, tag = 'smem constant byte address 0x4 - core index']
  #allocation1 [shape = 'u32[144,128]{1,0:T(1,128)}', space=vmem, size = 0x12000, scoped, tag = 'internal scratch']
  %s0 = inlined_call_operand.vmem [shape: f32[2,8,256], index: 0, kind: input, shape index: {}]
  %s1 = inlined_call_operand.vmem [shape: f32[72,8], index: 1, kind: input, shape index: {}]
  %s2 = inlined_call_operand.vmem [shape: f32[8,24], index: 2, kind: input, shape index: {}]
  %s3 = inlined_call_operand.vmem [shape: f32[80,1], index: 3, kind: input, shape index: {}]
  %s4 = inlined_call_operand.vmem [shape: f32[24,24], index: 4, kind: input, shape index: {}]
  %s5 = inlined_call_operand.hbm [shape: f32[2,8,256], index: 5, kind: output, shape index: {}]
  %s6 = sld [smem:[#allocation0]]
  $region53: #{tpu_custom_call.1} parent=0
    _
  %s8 = ssub.s32 1, %s6
  %s9 = scalar_select 0, %s8, %s6
  $region1: #{tpu_custom_call.1} parent=0
    #allocation2 [shape = 'u8[16384]{0}', space=vmem, size = 0x4000, scoped, tag = 'output window, operand 0']
    #allocation3 [shape = 's32[2]{0}', space=sflag, size = 0x8, scoped, tag = 'scoped memory for tpu_custom_call.1']
    %10 = vsyncpa [#allocation3], 0
    %s11 = scalar_lea.sflag [#allocation3], 1
    %12 = vsyncpa %s11, 0
    loop: start=0, step=1, limit=4
    $region2: #{tpu_custom_call.1} parent=1 // loop_pre_header
      _
    $region3: #{tpu_custom_call.1} parent=1 // loop_header
      %s14 = sphi 0, %s18
      %p15 = scmp.ge.s32.totalorder %s14, 4
      %s24 = sphi 0, %s26
      %s27 = sphi 0, %s24
      %s28 = sphi 0, %s27
      %s44 = sphi 0, %s28
      %s48 = sphi 0, %s48
      %s50 = sphi 0, %s48
      %s51 = sphi 0, %s50
      %s65 = sphi 0, %s51
      %s69 = sphi 0, %s69
      %s71 = sphi 0, %s69
      %s72 = sphi 0, %s71
      %s86 = sphi 0, %s72
      %s90 = sphi 0, %s90
      %s92 = sphi 0, %s90
      %s93 = sphi 0, %s92
      %s107 = sphi 0, %s93
      %s111 = sphi 0, %s111
      %s113 = sphi 0, %s111
      %s114 = sphi 0, %s113
      %s128 = sphi 0, %s114
      %s134 = sphi 0, %s136
      %s137 = sphi 0, %s134
      %s138 = sphi 0, %s137
      %s154 = sphi 0, %s138
    $region4: #{tpu_custom_call.1} parent=1 // loop_header_branch
      %17 = sbr.rel (%p15) target = $region8
    $region5: #{tpu_custom_call.1} parent=1 // loop_body
      %s19 = ssub.s32 %s14, 1
      %s20 = ssub.s32 %s14, 2
      %s21 = sadd.s32 %s14, 1
      %s22 = ssub.s32 %s14, %s21
      %p23 = scmp.eq.s32.totalorder %s22, 0
      %s25 = sadd.s32 %s24, 1
      %s26 = scalar_select %p23, %s24, %s25
      %p29 = pneg %p23
      %p30 = scmp.eq.s32.totalorder %s14, 1
      %p31 = por %p29, %p30
      %p32 = scmp.ne.s32.totalorder %s24, %s27
      %p33 = scmp.eq.s32.totalorder %s14, 0
      %p34 = por %p32, %p33
      %p35 = scmp.ne.s32.totalorder %s24, %s27
      %p36 = scmp.eq.s32.totalorder %s19, 1
      %p37 = por %p35, %p36
      %p38 = scmp.ne.s32.totalorder %s27, %s28
      %p39 = scmp.eq.s32.totalorder %s19, 0
      %p40 = por %p38, %p39
      %p41 = scmp.ne.s32.totalorder %s27, %s28
      %p42 = scmp.eq.s32.totalorder %s20, 1
      %p43 = por %p41, %p42
      %p45 = scmp.ne.s32.totalorder %s28, %s44
      %p46 = scmp.eq.s32.totalorder %s20, 0
      %p47 = por %p45, %p46
      %s49 = sadd.s32 %s48, 1
      %p52 = scmp.eq.s32.totalorder %s14, 1
      %p53 = scmp.ne.s32.totalorder %s48, %s50
      %p54 = scmp.eq.s32.totalorder %s14, 0
      %p55 = por %p53, %p54
      %p56 = scmp.ne.s32.totalorder %s48, %s50
      %p57 = scmp.eq.s32.totalorder %s19, 1
      %p58 = por %p56, %p57
      %p59 = scmp.ne.s32.totalorder %s50, %s51
      %p60 = scmp.eq.s32.totalorder %s19, 0
      %p61 = por %p59, %p60
      %p62 = scmp.ne.s32.totalorder %s50, %s51
      %p63 = scmp.eq.s32.totalorder %s20, 1
      %p64 = por %p62, %p63
      %p66 = scmp.ne.s32.totalorder %s51, %s65
      %p67 = scmp.eq.s32.totalorder %s20, 0
      %p68 = por %p66, %p67
      %s70 = sadd.s32 %s69, 1
      %p73 = scmp.eq.s32.totalorder %s14, 1
      %p74 = scmp.ne.s32.totalorder %s69, %s71
      %p75 = scmp.eq.s32.totalorder %s14, 0
      %p76 = por %p74, %p75
      %p77 = scmp.ne.s32.totalorder %s69, %s71
      %p78 = scmp.eq.s32.totalorder %s19, 1
      %p79 = por %p77, %p78
      %p80 = scmp.ne.s32.totalorder %s71, %s72
      %p81 = scmp.eq.s32.totalorder %s19, 0
      %p82 = por %p80, %p81
      %p83 = scmp.ne.s32.totalorder %s71, %s72
      %p84 = scmp.eq.s32.totalorder %s20, 1
      %p85 = por %p83, %p84
      %p87 = scmp.ne.s32.totalorder %s72, %s86
      %p88 = scmp.eq.s32.totalorder %s20, 0
      %p89 = por %p87, %p88
      %s91 = sadd.s32 %s90, 1
      %p94 = scmp.eq.s32.totalorder %s14, 1
      %p95 = scmp.ne.s32.totalorder %s90, %s92
      %p96 = scmp.eq.s32.totalorder %s14, 0
      %p97 = por %p95, %p96
      %p98 = scmp.ne.s32.totalorder %s90, %s92
      %p99 = scmp.eq.s32.totalorder %s19, 1
      %p100 = por %p98, %p99
      %p101 = scmp.ne.s32.totalorder %s92, %s93
      %p102 = scmp.eq.s32.totalorder %s19, 0
      %p103 = por %p101, %p102
      %p104 = scmp.ne.s32.totalorder %s92, %s93
      %p105 = scmp.eq.s32.totalorder %s20, 1
      %p106 = por %p104, %p105
      %p108 = scmp.ne.s32.totalorder %s93, %s107
      %p109 = scmp.eq.s32.totalorder %s20, 0
      %p110 = por %p108, %p109
      %s112 = sadd.s32 %s111, 1
      %p115 = scmp.eq.s32.totalorder %s14, 1
      %p116 = scmp.ne.s32.totalorder %s111, %s113
      %p117 = scmp.eq.s32.totalorder %s14, 0
      %p118 = por %p116, %p117
      %p119 = scmp.ne.s32.totalorder %s111, %s113
      %p120 = scmp.eq.s32.totalorder %s19, 1
      %p121 = por %p119, %p120
      %p122 = scmp.ne.s32.totalorder %s113, %s114
      %p123 = scmp.eq.s32.totalorder %s19, 0
      %p124 = por %p122, %p123
      %p125 = scmp.ne.s32.totalorder %s113, %s114
      %p126 = scmp.eq.s32.totalorder %s20, 1
      %p127 = por %p125, %p126
      %p129 = scmp.ne.s32.totalorder %s114, %s128
      %p130 = scmp.eq.s32.totalorder %s20, 0
      %p131 = por %p129, %p130
      %s132 = ssub.s32 %s14, %s21
      %p133 = scmp.eq.s32.totalorder %s132, 0
      %s135 = sadd.s32 %s134, 1
      %s136 = scalar_select %p133, %s134, %s135
      %p139 = pneg %p133
      %p140 = scmp.eq.s32.totalorder %s14, 1
      %p141 = por %p139, %p140
      %p142 = scmp.ne.s32.totalorder %s134, %s137
      %p143 = scmp.eq.s32.totalorder %s14, 0
      %p144 = por %p142, %p143
      %p145 = scmp.ne.s32.totalorder %s134, %s137
      %p146 = scmp.eq.s32.totalorder %s19, 1
      %p147 = por %p145, %p146
      %p148 = scmp.ne.s32.totalorder %s137, %s138
      %p149 = scmp.eq.s32.totalorder %s19, 0
      %p150 = por %p148, %p149
      %p151 = scmp.ne.s32.totalorder %s137, %s138
      %p152 = scmp.eq.s32.totalorder %s20, 1
      %p153 = por %p151, %p152
      %p155 = scmp.ne.s32.totalorder %s138, %s154
      %p156 = scmp.eq.s32.totalorder %s20, 0
      %p157 = por %p155, %p156
      %p158 = scmp.le.s32.totalorder 1, %s14
      %p159 = scmp.lt.s32.totalorder %s14, 3
      %p160 = pnand %p158, %p159
      %p161 = pneg %p160
      // Predicated region
      $region9: #{tpu_custom_call.1} parent=5 // pred_check
        _
      $region10: #{tpu_custom_call.1} parent=5 // pred_check_branch
        %163 = sbr.rel (%p160) target = $region12
      $region11: #{tpu_custom_call.1} parent=5 // pred_region
        %s164 = ssub.s32 %s14, 1
        // Predicated region
        $region13: #{tpu_custom_call.1} parent=11 // pred_check
          %p165 = pneg %p61
        $region14: #{tpu_custom_call.1} parent=11 // pred_check_branch
          %167 = sbr.rel (%p165) target = $region16
        $region15: #{tpu_custom_call.1} parent=11 // pred_region
          _
        $region16: #{tpu_custom_call.1} parent=11 // pred_fallthru
          _
        // Predicated region
        $region17: #{tpu_custom_call.1} parent=11 // pred_check
          %p168 = pneg %p82
        $region18: #{tpu_custom_call.1} parent=11 // pred_check_branch
          %170 = sbr.rel (%p168) target = $region20
        $region19: #{tpu_custom_call.1} parent=11 // pred_region
          _
        $region20: #{tpu_custom_call.1} parent=11 // pred_fallthru
          _
        // Predicated region
        $region21: #{tpu_custom_call.1} parent=11 // pred_check
          %p171 = pneg %p103
        $region22: #{tpu_custom_call.1} parent=11 // pred_check_branch
          %173 = sbr.rel (%p171) target = $region24
        $region23: #{tpu_custom_call.1} parent=11 // pred_region
          _
        $region24: #{tpu_custom_call.1} parent=11 // pred_fallthru
          _
        // Predicated region
        $region25: #{tpu_custom_call.1} parent=11 // pred_check
          %p174 = pneg %p124
        $region26: #{tpu_custom_call.1} parent=11 // pred_check_branch
          %176 = sbr.rel (%p174) target = $region28
        $region27: #{tpu_custom_call.1} parent=11 // pred_region
          _
        $region28: #{tpu_custom_call.1} parent=11 // pred_fallthru
          _
      $region12: #{tpu_custom_call.1} parent=5 // pred_fallthru
        _
      %p177 = scmp.lt.s32.totalorder %s14, 2
      // Predicated region
      $region29: #{tpu_custom_call.1} parent=5 // pred_check
        %p178 = pneg %p177
      $region30: #{tpu_custom_call.1} parent=5 // pred_check_branch
        %180 = sbr.rel (%p178) target = $region32
      $region31: #{tpu_custom_call.1} parent=5 // pred_region
        // Predicated region
        $region33: #{tpu_custom_call.1} parent=31 // pred_check
          %p181 = pneg %p34
        $region34: #{tpu_custom_call.1} parent=31 // pred_check_branch
          %183 = sbr.rel (%p181) target = $region36
        $region35: #{tpu_custom_call.1} parent=31 // pred_region
          %p184 = scmp.lt.s32.totalorder %s14, 1
          %s185 = scalar_select %p184, %s14, 1
          %s186 = smul.addr %s185, 2
          %s187 = smul.addr %s186, 8
          %s188 = scalar_lea.vmem %s0, %s187
        $region36: #{tpu_custom_call.1} parent=31 // pred_fallthru
          _
      $region32: #{tpu_custom_call.1} parent=5 // pred_fallthru
        _
      %p189 = scmp.le.s32.totalorder 1, %s14
      %p190 = scmp.lt.s32.totalorder %s14, 3
      %p191 = pnand %p189, %p190
      %p192 = pneg %p191
      // Predicated region
      $region37: #{tpu_custom_call.1} parent=5 // pred_check
        _
      $region38: #{tpu_custom_call.1} parent=5 // pred_check_branch
        %194 = sbr.rel (%p191) target = $region40
      $region39: #{tpu_custom_call.1} parent=5 // pred_region
        %s195 = ssub.s32 %s14, 1
        %p196 = scmp.lt.s32.totalorder %s19, 1
        %s197 = scalar_select %p196, %s19, 1
        %s198 = smul.addr %s197, 2
        %s199 = smul.addr %s198, 8
        %s200 = scalar_lea.vmem %s0, %s199
        %p201 = pneg %p40
        %p202 = pneg %p37
        %p203 = pneg %p61
        %p204 = pneg %p58
        %p205 = pneg %p82
        %p206 = pneg %p79
        %p207 = pneg %p103
        %p208 = pneg %p100
        %p209 = pneg %p124
        %p210 = pneg %p121
        %p211 = pneg %p150
        %p212 = pneg %p147
        %s213 = sand.u32 %s137, 1
        %s214 = scalar_lea.sflag [#allocation3], %s213
        %s215 = sand.u32 %s137, 1
        %s216 = smul.addr %s215, 16
        %s217 = scalar_lea.vmem [#allocation2], %s216
        %p218 = scmp.lt.s32.totalorder %s19, 1
        %s219 = scalar_select %p218, %s19, 1
        %s220 = smul.addr %s219, 2
        %s221 = smul.addr %s220, 8
        %s222 = scalar_lea.vmem %s0, %s221
        %v223 = vld [vmem:[%s222] sm:$0xff]
        %v224 = vld [vmem:[%s222 + $0x8] sm:$0xff]
        %v225 = vadd.f32 %v223, %v224
        %226 = vadd.xlane.f32.xlu0 %v225
        %v227 = vpop.xlane.xlu0 %226
        %v228 = vrot.slane %v227, 4
        %v229 = vadd.f32 %v227, %v228
        %v230 = vrot.slane %v229, 2
        %v231 = vadd.f32 %v229, %v230
        %v232 = vrot.slane %v231, 1
        %v233 = vadd.f32 %v231, %v232
        %s234 = vtos %v233
        %v235 = vrcp.pop 2048.0
        %s236 = vtos %v235
        %s237 = smul.f32 %s234, %s236
        %v238 = vmul.f32 %v223, %v223
        %v239 = vmul.f32 %v224, %v224
        %v240 = vadd.f32 %v238, %v239
        %241 = vadd.xlane.f32.xlu0 %v240
        %v242 = vpop.xlane.xlu0 %241
        %v243 = vrot.slane %v242, 4
        %v244 = vadd.f32 %v242, %v243
        %v245 = vrot.slane %v244, 2
        %v246 = vadd.f32 %v244, %v245
        %v247 = vrot.slane %v246, 1
        %v248 = vadd.f32 %v246, %v247
        %s249 = vtos %v248
        %v250 = vrcp.pop 2048.0
        %s251 = vtos %v250
        %s252 = smul.f32 %s249, %s251
        %s253 = smul.f32 %s237, %s237
        %s254 = ssub.f32 %s252, %s253
        %v255 = vstv %s237
        %v256 = vsub.f32 %v223, %v255
        %v257 = vsub.f32 %v224, %v255
        %s258 = sadd.f32 %s254, 1e-05
        %v259 = vstv %s258
        %v260 = vrsqrt.pop %v259
        %s261 = vtos %v260
        %v262 = vstv %s261
        %v263 = vmul.f32 %v256, %v262
        %v264 = vmul.f32 %v257, %v262
        %v265 = vld [vmem:[%s3] sm:$0xff]
        %v266 = vld [vmem:[%s3 + $0x8] sm:$0xff]
        %v267 = vld [vmem:[%s3 + $0x10] sm:$0xff]
        %v268 = vld [vmem:[%s3 + $0x18] sm:$0xff]
        %v269 = vld [vmem:[%s3 + $0x20] sm:$0xff]
        %v270 = vld [vmem:[%s3 + $0x28] sm:$0xff]
        %v271 = vld [vmem:[%s3 + $0x30] sm:$0xff]
        %v272 = vld [vmem:[%s3 + $0x38] sm:$0xff]
        %v273 = vld [vmem:[%s3 + $0x40] sm:$0xff]
        %v274 = vld [vmem:[%s3 + $0x48] sm:$0xff]
        %v275 = vld [vmem:[%s1] sm:$0xff]
        %v276 = vld [vmem:[%s1 + $0x8] sm:$0xff]
        %v277 = vld [vmem:[%s1 + $0x10] sm:$0xff]
        %v278 = vld [vmem:[%s1 + $0x18] sm:$0xff]
        %v279 = vld [vmem:[%s1 + $0x20] sm:$0xff]
        %v280 = vld [vmem:[%s1 + $0x28] sm:$0xff]
        %v281 = vld [vmem:[%s1 + $0x30] sm:$0xff]
        %v282 = vld [vmem:[%s1 + $0x38] sm:$0xff]
        %v283 = vld [vmem:[%s1 + $0x40] sm:$0xff]
        %285 = vset.pattern.permute.xlu0 0
        %286 = vperm.xlu0 %285, %v265
        %v287 = vpop.permute.xlu0 %286
        %290 = vset.pattern.permute.xlu0 0
        %291 = vperm.xlu0 %290, %v266
        %v292 = vpop.permute.xlu0 %291
        %295 = vset.pattern.permute.xlu0 0
        %296 = vperm.xlu0 %295, %v267
        %v297 = vpop.permute.xlu0 %296
        %300 = vset.pattern.permute.xlu0 0
        %301 = vperm.xlu0 %300, %v268
        %v302 = vpop.permute.xlu0 %301
        %305 = vset.pattern.permute.xlu0 0
        %306 = vperm.xlu0 %305, %v269
        %v307 = vpop.permute.xlu0 %306
        %310 = vset.pattern.permute.xlu0 0
        %311 = vperm.xlu0 %310, %v270
        %v312 = vpop.permute.xlu0 %311
        %315 = vset.pattern.permute.xlu0 0
        %316 = vperm.xlu0 %315, %v271
        %v317 = vpop.permute.xlu0 %316
        %320 = vset.pattern.permute.xlu0 0
        %321 = vperm.xlu0 %320, %v272
        %v322 = vpop.permute.xlu0 %321
        %325 = vset.pattern.permute.xlu0 0
        %326 = vperm.xlu0 %325, %v273
        %v327 = vpop.permute.xlu0 %326
        %vm329 = vcmask 64512
        %v331 = vsel %vm329, %v275, 0
        %v334 = vsel %vm329, %v276, 0
        %v337 = vsel %vm329, %v277, 0
        %v340 = vsel %vm329, %v278, 0
        %v343 = vsel %vm329, %v279, 0
        %v346 = vsel %vm329, %v280, 0
        %v349 = vsel %vm329, %v281, 0
        %v352 = vsel %vm329, %v282, 0
        %v355 = vsel %vm329, %v283, 0
        %357 = vmatprep.subr.mxu0 %v264
        %358 = vmatpush1.msra.mxu0 %v263
        %359 = vmatprep.subr.mxu0 0.0
        %360 = vmatpush1.msra.mxu0 0.0
        %361 = vmatprep.subr.mxu0 0.0
        %362 = vmatpush1.msra.mxu0 0.0
        %363 = vmatprep.subr.mxu0 0.0
        %364 = vmatpush1.msra.mxu0 0.0
        %365 = vmatprep.subr.mxu0 0.0
        %366 = vmatpush1.msra.mxu0 0.0
        %367 = vmatprep.subr.mxu0 0.0
        %368 = vmatpush1.msra.mxu0 0.0
        %369 = vmatprep.subr.mxu0 0.0
        %370 = vmatpush1.msra.mxu0 0.0
        %371 = vmatprep.subr.mxu0 0.0
        %372 = vmatpush1.msra.mxu0 0.0
        %373 = vmatprep.subr.mxu0 0.0
        %374 = vmatpush1.msra.mxu0 0.0
        %375 = vmatprep.subr.mxu0 0.0
        %376 = vmatpush1.msra.mxu0 0.0
        %377 = vmatprep.subr.mxu0 0.0
        %378 = vmatpush1.msra.mxu0 0.0
        %379 = vmatprep.subr.mxu0 0.0
        %380 = vmatpush1.msra.mxu0 0.0
        %381 = vmatprep.subr.mxu0 0.0
        %382 = vmatpush1.msra.mxu0 0.0
        %383 = vmatprep.subr.mxu0 0.0
        %384 = vmatpush1.msra.mxu0 0.0
        %385 = vmatprep.subr.mxu0 0.0
        %386 = vmatpush1.msra.mxu0 0.0
        %387 = vmatprep.subr.mxu0 0.0
        %388 = vmatpush1.msra.mxu0 0.0
        %389 = vmatprep.subr.mxu0 0.0
        %390 = vmatpush1.msra.mxu0 0.0
        %391 = vmatprep.subr.mxu0 0.0
        %392 = vmatpush1.msra.mxu0 0.0
        %393 = vmatprep.subr.mxu0 0.0
        %394 = vmatpush1.msra.mxu0 0.0
        %395 = vmatprep.subr.mxu0 0.0
        %396 = vmatpush1.msra.mxu0 0.0
        %397 = vmatprep.subr.mxu0 0.0
        %398 = vmatpush1.msra.mxu0 0.0
        %399 = vmatprep.subr.mxu0 0.0
        %400 = vmatpush1.msra.mxu0 0.0
        %401 = vmatprep.subr.mxu0 0.0
        %402 = vmatpush1.msra.mxu0 0.0
        %403 = vmatprep.subr.mxu0 0.0
        %404 = vmatpush1.msra.mxu0 0.0
        %405 = vmatprep.subr.mxu0 0.0
        %406 = vmatpush1.msra.mxu0 0.0
        %407 = vmatprep.subr.mxu0 0.0
        %408 = vmatpush1.msra.mxu0 0.0
        %409 = vmatprep.subr.mxu0 0.0
        %410 = vmatpush1.msra.mxu0 0.0
        %411 = vmatprep.subr.mxu0 0.0
        %412 = vmatpush1.msra.mxu0 0.0
        %413 = vmatprep.subr.mxu0 0.0
        %414 = vmatpush1.msra.mxu0 0.0
        %415 = vmatprep.subr.mxu0 0.0
        %416 = vmatpush1.msra.mxu0 0.0
        %417 = vmatprep.subr.mxu0 0.0
        %418 = vmatpush1.msra.mxu0 0.0
        %419 = vmatprep.subr.mxu0 0.0
        %420 = vmatpush1.msra.mxu0 0.0
        %421 = vmatprep.mubr.f32.mxu0 0.0
        %422 = vmatmul.mubr.f32.gmra.mrb[0].mxu0 %v331
        %v423 = vpop.f32.mrb[0].mxu0
        %v424 = vadd.f32 %v287, %v423
        %v425 = vpop.f32.mrb[0].mxu0
        %v426 = vadd.f32 %v287, %v425
        %427 = vmatprep.mubr.f32.mxu0 0.0
        %428 = vmatmul.mubr.f32.gmra.mrb[0].mxu0 %v334
        %v429 = vpop.f32.mrb[0].mxu0
        %v430 = vadd.f32 %v292, %v429
        %v431 = vpop.f32.mrb[0].mxu0
        %v432 = vadd.f32 %v292, %v431
        %433 = vmatprep.mubr.f32.mxu0 0.0
        %434 = vmatmul.mubr.f32.gmra.mrb[0].mxu0 %v337
        %v435 = vpop.f32.mrb[0].mxu0
        %v436 = vadd.f32 %v297, %v435
        %v437 = vpop.f32.mrb[0].mxu0
        %v438 = vadd.f32 %v297, %v437
        %439 = vmatprep.mubr.f32.mxu0 0.0
        %440 = vmatmul.mubr.f32.gmra.mrb[0].mxu0 %v340
        %v441 = vpop.f32.mrb[0].mxu0
        %v442 = vadd.f32 %v302, %v441
        %v443 = vpop.f32.mrb[0].mxu0
        %v444 = vadd.f32 %v302, %v443
        %445 = vmatprep.mubr.f32.mxu0 0.0
        %446 = vmatmul.mubr.f32.gmra.mrb[0].mxu0 %v343
        %v447 = vpop.f32.mrb[0].mxu0
        %v448 = vadd.f32 %v307, %v447
        %v449 = vpop.f32.mrb[0].mxu0
        %v450 = vadd.f32 %v307, %v449
        %451 = vmatprep.mubr.f32.mxu0 0.0
        %452 = vmatmul.mubr.f32.gmra.mrb[0].mxu0 %v346
        %v453 = vpop.f32.mrb[0].mxu0
        %v454 = vadd.f32 %v312, %v453
        %v455 = vpop.f32.mrb[0].mxu0
        %v456 = vadd.f32 %v312, %v455
        %457 = vmatprep.mubr.f32.mxu0 0.0
        %458 = vmatmul.mubr.f32.gmra.mrb[0].mxu0 %v349
        %v459 = vpop.f32.mrb[0].mxu0
        %v460 = vadd.f32 %v317, %v459
        %v461 = vpop.f32.mrb[0].mxu0
        %v462 = vadd.f32 %v317, %v461
        %463 = vmatprep.mubr.f32.mxu0 0.0
        %464 = vmatmul.mubr.f32.gmra.mrb[0].mxu0 %v352
        %v465 = vpop.f32.mrb[0].mxu0
        %v466 = vadd.f32 %v322, %v465
        %v467 = vpop.f32.mrb[0].mxu0
        %v468 = vadd.f32 %v322, %v467
        %469 = vmatprep.mubr.f32.mxu0 0.0
        %470 = vmatmul.mubr.f32.gmra.mrb[0].mxu0 %v355
        %v471 = vpop.f32.mrb[0].mxu0
        %v472 = vadd.f32 %v327, %v471
        %v473 = vpop.f32.mrb[0].mxu0
        %v474 = vadd.f32 %v327, %v473
        %475 = vdwg.mxu0
        %vm476 = vcmp.gt.f32.partialorder %v424, 0.0
        %vm477 = vcmp.gt.f32.partialorder %v426, 0.0
        %vm478 = vcmp.gt.f32.partialorder %v430, 0.0
        %vm479 = vcmp.gt.f32.partialorder %v432, 0.0
        %vm480 = vcmp.gt.f32.partialorder %v436, 0.0
        %vm481 = vcmp.gt.f32.partialorder %v438, 0.0
        %v482 = vadd.f32 %v424, 1.0
        %v483 = vadd.f32 %v426, 1.0
        %v484 = vadd.f32 %v430, 1.0
        %v485 = vadd.f32 %v432, 1.0
        %v486 = vadd.f32 %v436, 1.0
        %v487 = vadd.f32 %v438, 1.0
        %v488 = vmul.f32 %v424, 1.442695
        %v489 = vpow.pop %v488
        %v490 = vmul.f32 %v426, 1.442695
        %v491 = vpow.pop %v490
        %v492 = vmul.f32 %v430, 1.442695
        %v493 = vpow.pop %v492
        %v494 = vmul.f32 %v432, 1.442695
        %v495 = vpow.pop %v494
        %v496 = vmul.f32 %v436, 1.442695
        %v497 = vpow.pop %v496
        %v498 = vmul.f32 %v438, 1.442695
        %v499 = vpow.pop %v498
        %v500 = vsel %vm476, %v482, %v489
        %v501 = vsel %vm477, %v483, %v491
        %v502 = vsel %vm478, %v484, %v493
        %v503 = vsel %vm479, %v485, %v495
        %v504 = vsel %vm480, %v486, %v497
        %v505 = vsel %vm481, %v487, %v499
        %vm506 = vcmp.gt.f32.partialorder %v442, 0.0
        %vm507 = vcmp.gt.f32.partialorder %v444, 0.0
        %vm508 = vcmp.gt.f32.partialorder %v448, 0.0
        %vm509 = vcmp.gt.f32.partialorder %v450, 0.0
        %vm510 = vcmp.gt.f32.partialorder %v454, 0.0
        %vm511 = vcmp.gt.f32.partialorder %v456, 0.0
        %v512 = vadd.f32 %v442, 1.0
        %v513 = vadd.f32 %v444, 1.0
        %v514 = vadd.f32 %v448, 1.0
        %v515 = vadd.f32 %v450, 1.0
        %v516 = vadd.f32 %v454, 1.0
        %v517 = vadd.f32 %v456, 1.0
        %v518 = vmul.f32 %v442, 1.442695
        %v519 = vpow.pop %v518
        %v520 = vmul.f32 %v444, 1.442695
        %v521 = vpow.pop %v520
        %v522 = vmul.f32 %v448, 1.442695
        %v523 = vpow.pop %v522
        %v524 = vmul.f32 %v450, 1.442695
        %v525 = vpow.pop %v524
        %v526 = vmul.f32 %v454, 1.442695
        %v527 = vpow.pop %v526
        %v528 = vmul.f32 %v456, 1.442695
        %v529 = vpow.pop %v528
        %v530 = vsel %vm506, %v512, %v519
        %v531 = vsel %vm507, %v513, %v521
        %v532 = vsel %vm508, %v514, %v523
        %v533 = vsel %vm509, %v515, %v525
        %v534 = vsel %vm510, %v516, %v527
        %v535 = vsel %vm511, %v517, %v529
        %v536 = vadd.f32 %v530, %v531
        %537 = vadd.xlane.f32.xlu0 %v536
        %v538 = vpop.xlane.xlu0 %537
        %v539 = vadd.f32 %v532, %v533
        %540 = vadd.xlane.f32.xlu0 %v539
        %v541 = vpop.xlane.xlu0 %540
        %v542 = vadd.f32 %v534, %v535
        %543 = vadd.xlane.f32.xlu0 %v542
        %v544 = vpop.xlane.xlu0 %543
        %v545 = vmax.f32 %v538, 1e-05
        %v546 = vmax.f32 %v541, 1e-05
        %v547 = vmax.f32 %v544, 1e-05
        %v548 = vrcp.pop %v545
        %v549 = vrcp.pop %v546
        %v550 = vrcp.pop %v547
        %v551 = vmul.f32 %v530, %v548
        %v552 = vmul.f32 %v531, %v548
        %v553 = vmul.f32 %v532, %v549
        %v554 = vmul.f32 %v533, %v549
        %v555 = vmul.f32 %v534, %v550
        %v556 = vmul.f32 %v535, %v550
        %557 = vmatprep.subr.mxu0 %v552
        %558 = vmatpush1.xpose.msra.mxu0 %v551
        %559 = vmatprep.subr.mxu0 %v554
        %560 = vmatpush1.xpose.msra.mxu0 %v553
        %561 = vmatprep.subr.mxu0 %v556
        %562 = vmatpush1.xpose.msra.mxu0 %v555
        %563 = vmatprep.subr.mxu0 0.0
        %564 = vmatpush1.xpose.msra.mxu0 0.0
        %565 = vmatprep.subr.mxu0 0.0
        %566 = vmatpush1.xpose.msra.mxu0 0.0
        %567 = vmatprep.subr.mxu0 0.0
        %568 = vmatpush1.xpose.msra.mxu0 0.0
        %569 = vmatprep.subr.mxu0 0.0
        %570 = vmatpush1.xpose.msra.mxu0 0.0
        %571 = vmatprep.subr.mxu0 0.0
        %572 = vmatpush1.xpose.msra.mxu0 0.0
        %573 = vmatprep.subr.mxu0 0.0
        %574 = vmatpush1.xpose.msra.mxu0 0.0
        %575 = vmatprep.subr.mxu0 0.0
        %576 = vmatpush1.xpose.msra.mxu0 0.0
        %577 = vmatprep.subr.mxu0 0.0
        %578 = vmatpush1.xpose.msra.mxu0 0.0
        %579 = vmatprep.subr.mxu0 0.0
        %580 = vmatpush1.xpose.msra.mxu0 0.0
        %581 = vmatprep.subr.mxu0 0.0
        %582 = vmatpush1.xpose.msra.mxu0 0.0
        %583 = vmatprep.subr.mxu0 0.0
        %584 = vmatpush1.xpose.msra.mxu0 0.0
        %585 = vmatprep.subr.mxu0 0.0
        %586 = vmatpush1.xpose.msra.mxu0 0.0
        %587 = vmatprep.subr.mxu0 0.0
        %588 = vmatpush1.xpose.msra.mxu0 0.0
        %589 = vmatprep.subr.mxu0 0.0
        %590 = vmatpush1.xpose.msra.mxu0 0.0
        %591 = vmatprep.subr.mxu0 0.0
        %592 = vmatpush1.xpose.msra.mxu0 0.0
        %593 = vmatprep.subr.mxu0 0.0
        %594 = vmatpush1.xpose.msra.mxu0 0.0
        %595 = vmatprep.subr.mxu0 0.0
        %596 = vmatpush1.xpose.msra.mxu0 0.0
        %597 = vmatprep.subr.mxu0 0.0
        %598 = vmatpush1.xpose.msra.mxu0 0.0
        %599 = vmatprep.subr.mxu0 0.0
        %600 = vmatpush1.xpose.msra.mxu0 0.0
        %601 = vmatprep.subr.mxu0 0.0
        %602 = vmatpush1.xpose.msra.mxu0 0.0
        %603 = vmatprep.subr.mxu0 0.0
        %604 = vmatpush1.xpose.msra.mxu0 0.0
        %605 = vmatprep.subr.mxu0 0.0
        %606 = vmatpush1.xpose.msra.mxu0 0.0
        %607 = vmatprep.subr.mxu0 0.0
        %608 = vmatpush1.xpose.msra.mxu0 0.0
        %609 = vmatprep.subr.mxu0 0.0
        %610 = vmatpush1.xpose.msra.mxu0 0.0
        %611 = vmatprep.subr.mxu0 0.0
        %612 = vmatpush1.xpose.msra.mxu0 0.0
        %613 = vmatprep.subr.mxu0 0.0
        %614 = vmatpush1.xpose.msra.mxu0 0.0
        %615 = vmatprep.subr.mxu0 0.0
        %616 = vmatpush1.xpose.msra.mxu0 0.0
        %617 = vmatprep.subr.mxu0 0.0
        %618 = vmatpush1.xpose.msra.mxu0 0.0
        %619 = vmatprep.subr.mxu0 0.0
        %620 = vmatpush1.xpose.msra.mxu0 0.0
        %621 = vmatprep.mubr.f32.mxu0 %v462
        %622 = vmatmul.mubr.f32.gmra.mrb[0].mxu0 %v460
        %v623 = vpop.f32.mrb[0].mxu0
        %v624 = vadd.f32 0.0, %v623
        %v625 = vpop.f32.mrb[0].mxu0
        %626 = vmatprep.mubr.f32.mxu0 %v468
        %627 = vmatmul.mubr.f32.gmra.mrb[0].mxu0 %v466
        %v628 = vpop.f32.mrb[0].mxu0
        %v629 = vadd.f32 0.0, %v628
        %v630 = vpop.f32.mrb[0].mxu0
        %631 = vmatprep.mubr.f32.mxu0 %v474
        %632 = vmatmul.mubr.f32.gmra.mrb[0].mxu0 %v472
        %v633 = vpop.f32.mrb[0].mxu0
        %v634 = vadd.f32 0.0, %v633
        %v635 = vpop.f32.mrb[0].mxu0
        %636 = vdwg.mxu0
        %v637 = vld [vmem:[%s4] sm:$0xff]
        %v638 = vld [vmem:[%s4 + $0x8] sm:$0xff]
        %v639 = vld [vmem:[%s4 + $0x10] sm:$0xff]
        %v640 = vmul.f32 %v624, %v637
        %v641 = vmul.f32 %v629, %v638
        %v642 = vmul.f32 %v634, %v639
        %v643 = vld [vmem:[%s2] sm:$0xff]
        %vm644 = vcmask 195584
        %v646 = vsel %vm644, %v643, 0
        %648 = vmatprep.subr.mxu0 0.0
        %649 = vmatpush1.msra.mxu0 %v640
        %650 = vmatprep.subr.mxu0 0.0
        %651 = vmatpush1.msra.mxu0 %v641
        %652 = vmatprep.subr.mxu0 0.0
        %653 = vmatpush1.msra.mxu0 %v642
        %654 = vmatprep.subr.mxu0 0.0
        %655 = vmatpush1.msra.mxu0 0.0
        %656 = vmatprep.subr.mxu0 0.0
        %657 = vmatpush1.msra.mxu0 0.0
        %658 = vmatprep.subr.mxu0 0.0
        %659 = vmatpush1.msra.mxu0 0.0
        %660 = vmatprep.subr.mxu0 0.0
        %661 = vmatpush1.msra.mxu0 0.0
        %662 = vmatprep.subr.mxu0 0.0
        %663 = vmatpush1.msra.mxu0 0.0
        %664 = vmatprep.subr.mxu0 0.0
        %665 = vmatpush1.msra.mxu0 0.0
        %666 = vmatprep.subr.mxu0 0.0
        %667 = vmatpush1.msra.mxu0 0.0
        %668 = vmatprep.subr.mxu0 0.0
        %669 = vmatpush1.msra.mxu0 0.0
        %670 = vmatprep.subr.mxu0 0.0
        %671 = vmatpush1.msra.mxu0 0.0
        %672 = vmatprep.subr.mxu0 0.0
        %673 = vmatpush1.msra.mxu0 0.0
        %674 = vmatprep.subr.mxu0 0.0
        %675 = vmatpush1.msra.mxu0 0.0
        %676 = vmatprep.subr.mxu0 0.0
        %677 = vmatpush1.msra.mxu0 0.0
        %678 = vmatprep.subr.mxu0 0.0
        %679 = vmatpush1.msra.mxu0 0.0
        %680 = vmatprep.subr.mxu0 0.0
        %681 = vmatpush1.msra.mxu0 0.0
        %682 = vmatprep.subr.mxu0 0.0
        %683 = vmatpush1.msra.mxu0 0.0
        %684 = vmatprep.subr.mxu0 0.0
        %685 = vmatpush1.msra.mxu0 0.0
        %686 = vmatprep.subr.mxu0 0.0
        %687 = vmatpush1.msra.mxu0 0.0
        %688 = vmatprep.subr.mxu0 0.0
        %689 = vmatpush1.msra.mxu0 0.0
        %690 = vmatprep.subr.mxu0 0.0
        %691 = vmatpush1.msra.mxu0 0.0
        %692 = vmatprep.subr.mxu0 0.0
        %693 = vmatpush1.msra.mxu0 0.0
        %694 = vmatprep.subr.mxu0 0.0
        %695 = vmatpush1.msra.mxu0 0.0
        %696 = vmatprep.subr.mxu0 0.0
        %697 = vmatpush1.msra.mxu0 0.0
        %698 = vmatprep.subr.mxu0 0.0
        %699 = vmatpush1.msra.mxu0 0.0
        %700 = vmatprep.subr.mxu0 0.0
        %701 = vmatpush1.msra.mxu0 0.0
        %702 = vmatprep.subr.mxu0 0.0
        %703 = vmatpush1.msra.mxu0 0.0
        %704 = vmatprep.subr.mxu0 0.0
        %705 = vmatpush1.msra.mxu0 0.0
        %706 = vmatprep.subr.mxu0 0.0
        %707 = vmatpush1.msra.mxu0 0.0
        %708 = vmatprep.subr.mxu0 0.0
        %709 = vmatpush1.msra.mxu0 0.0
        %710 = vmatprep.subr.mxu0 0.0
        %711 = vmatpush1.msra.mxu0 0.0
        %712 = vmatprep.mubr.f32.mxu0 0.0
        %713 = vmatmul.mubr.f32.gmra.mrb[0].mxu0 %v646
        %v714 = vpop.f32.mrb[0].mxu0
        %v715 = vadd.f32 0.0, %v714
        %v716 = vpop.f32.mrb[0].mxu0
        %717 = vdwg.mxu0
        %719 = vset.pattern.permute.xlu0 0
        %720 = vperm.xlu0 %719, %v274
        %v721 = vpop.permute.xlu0 %720
        %v724 = vsel %vm644, %v715, 0
        %726 = vmatprep.subr.mxu0 %v501
        %727 = vmatpush1.msra.mxu0 %v500
        %728 = vmatprep.subr.mxu0 %v503
        %729 = vmatpush1.msra.mxu0 %v502
        %730 = vmatprep.subr.mxu0 %v505
        %731 = vmatpush1.msra.mxu0 %v504
        %732 = vmatprep.subr.mxu0 0.0
        %733 = vmatpush1.msra.mxu0 0.0
        %734 = vmatprep.subr.mxu0 0.0
        %735 = vmatpush1.msra.mxu0 0.0
        %736 = vmatprep.subr.mxu0 0.0
        %737 = vmatpush1.msra.mxu0 0.0
        %738 = vmatprep.subr.mxu0 0.0
        %739 = vmatpush1.msra.mxu0 0.0
        %740 = vmatprep.subr.mxu0 0.0
        %741 = vmatpush1.msra.mxu0 0.0
        %742 = vmatprep.subr.mxu0 0.0
        %743 = vmatpush1.msra.mxu0 0.0
        %744 = vmatprep.subr.mxu0 0.0
        %745 = vmatpush1.msra.mxu0 0.0
        %746 = vmatprep.subr.mxu0 0.0
        %747 = vmatpush1.msra.mxu0 0.0
        %748 = vmatprep.subr.mxu0 0.0
        %749 = vmatpush1.msra.mxu0 0.0
        %750 = vmatprep.subr.mxu0 0.0
        %751 = vmatpush1.msra.mxu0 0.0
        %752 = vmatprep.subr.mxu0 0.0
        %753 = vmatpush1.msra.mxu0 0.0
        %754 = vmatprep.subr.mxu0 0.0
        %755 = vmatpush1.msra.mxu0 0.0
        %756 = vmatprep.subr.mxu0 0.0
        %757 = vmatpush1.msra.mxu0 0.0
        %758 = vmatprep.subr.mxu0 0.0
        %759 = vmatpush1.msra.mxu0 0.0
        %760 = vmatprep.subr.mxu0 0.0
        %761 = vmatpush1.msra.mxu0 0.0
        %762 = vmatprep.subr.mxu0 0.0
        %763 = vmatpush1.msra.mxu0 0.0
        %764 = vmatprep.subr.mxu0 0.0
        %765 = vmatpush1.msra.mxu0 0.0
        %766 = vmatprep.subr.mxu0 0.0
        %767 = vmatpush1.msra.mxu0 0.0
        %768 = vmatprep.subr.mxu0 0.0
        %769 = vmatpush1.msra.mxu0 0.0
        %770 = vmatprep.subr.mxu0 0.0
        %771 = vmatpush1.msra.mxu0 0.0
        %772 = vmatprep.subr.mxu0 0.0
        %773 = vmatpush1.msra.mxu0 0.0
        %774 = vmatprep.subr.mxu0 0.0
        %775 = vmatpush1.msra.mxu0 0.0
        %776 = vmatprep.subr.mxu0 0.0
        %777 = vmatpush1.msra.mxu0 0.0
        %778 = vmatprep.subr.mxu0 0.0
        %779 = vmatpush1.msra.mxu0 0.0
        %780 = vmatprep.subr.mxu0 0.0
        %781 = vmatpush1.msra.mxu0 0.0
        %782 = vmatprep.subr.mxu0 0.0
        %783 = vmatpush1.msra.mxu0 0.0
        %784 = vmatprep.subr.mxu0 0.0
        %785 = vmatpush1.msra.mxu0 0.0
        %786 = vmatprep.subr.mxu0 0.0
        %787 = vmatpush1.msra.mxu0 0.0
        %788 = vmatprep.subr.mxu0 0.0
        %789 = vmatpush1.msra.mxu0 0.0
        %790 = vmatprep.mubr.f32.mxu0 0.0
        %791 = vmatmul.mubr.f32.gmra.mrb[0].mxu0 %v724
        %v792 = vpop.f32.mrb[0].mxu0
        %v793 = vadd.f32 %v721, %v792
        %v794 = vpop.f32.mrb[0].mxu0
        %v795 = vadd.f32 %v721, %v794
        %796 = vdwg.mxu0
        %797 = vst [vmem:[%s217] sm:$0xff] %v793
        %798 = vst [vmem:[%s217 + $0x8] sm:$0xff] %v795
        %s799 = sand.u32 %s137, 1
        %s800 = scalar_lea.sflag [#allocation3], %s799
        %s801 = sand.u32 %s137, 1
        %s802 = smul.addr %s801, 16
        %s803 = scalar_lea.vmem [#allocation2], %s802
        // Predicated region
        $region41: #{tpu_custom_call.1} parent=39 // pred_check
          %p804 = pneg %p147
        $region42: #{tpu_custom_call.1} parent=39 // pred_check_branch
          %806 = sbr.rel (%p804) target = $region44
        $region43: #{tpu_custom_call.1} parent=39 // pred_region
          %s808 = ssub.s32 256, 256
          %809 = vsyncadd %s800, %s808
          %s810 = smul.addr %s19, 2
          %s811 = smul.addr %s810, 128
          %s812 = scalar_lea.hbm %s5, %s811
          %s814 = sshll.u32 %s803, 4
          %s815 = int_to_ptr.vmem [resolvable:$true] %s814
          %817 = dma.vmem_to_hbm [thread:$0]  %s815, 256, %s812, %s800
        $region44: #{tpu_custom_call.1} parent=39 // pred_fallthru
          _
      $region40: #{tpu_custom_call.1} parent=5 // pred_fallthru
        _
      %p818 = scmp.le.s32.totalorder 2, %s14
      // Predicated region
      $region45: #{tpu_custom_call.1} parent=5 // pred_check
        %p819 = pneg %p818
      $region46: #{tpu_custom_call.1} parent=5 // pred_check_branch
        %821 = sbr.rel (%p819) target = $region48
      $region47: #{tpu_custom_call.1} parent=5 // pred_region
        %s822 = ssub.s32 %s14, 2
        // Predicated region
        $region49: #{tpu_custom_call.1} parent=47 // pred_check
          %p823 = pneg %p153
        $region50: #{tpu_custom_call.1} parent=47 // pred_check_branch
          %825 = sbr.rel (%p823) target = $region52
        $region51: #{tpu_custom_call.1} parent=47 // pred_region
          %s826 = sand.u32 %s138, 1
          %s827 = scalar_lea.sflag [#allocation3], %s826
          %s828 = sand.u32 %s138, 1
          %s829 = smul.addr %s828, 16
          %s830 = scalar_lea.vmem [#allocation2], %s829
          %831 = dma.done %s827, 256
        $region52: #{tpu_custom_call.1} parent=47 // pred_fallthru
          _
      $region48: #{tpu_custom_call.1} parent=5 // pred_fallthru
        _
    $region6: #{tpu_custom_call.1} parent=1 // loop_footer
      %s18 = sadd.s32 1, %s14
    $region7: #{tpu_custom_call.1} parent=1 // loop_footer_branch
      %13 = sbr.rel target = $region3
    $region8: #{tpu_custom_call.1} parent=1 // loop_exit
      _
    %832 = vsyncpa [#allocation3], 1
    %s833 = scalar_lea.sflag [#allocation3], 1
    %834 = vsyncpa %s833, 1

</llo_original>
